<compile_context>
chip_gen: v5e
topology: v5e:2x2
jax: 0.10.0
libtpu: 0.0.40
codegen_flags: <defaults>
</compile_context>

<pallas_src>
import jax
import jax.numpy as jnp
from jax.experimental import pallas as pl
from jax.experimental.pallas import tpu as pltpu


def _grayscale_kernel(x_ref, o_ref):
    # x_ref: (1, 1, T) single-channel tile; o_ref: (1, 3, T) three-channel tile.
    # One input DMA per tile, in-VMEM broadcast, one lane-dense output store.
    o_ref[...] = jnp.broadcast_to(x_ref[...], o_ref.shape)


def _pick_tile(hw, max_lanes):
    """Largest divisor of hw that is a multiple of 128 and <= max_lanes.

    Guarantees evenly-divided blocks (no partial trailing tile -> no masked
    stores). Falls back to the full extent when hw is not lane-aligned
    (block dim == array dim is always legal).
    """
    if hw % 128 != 0:
        return hw
    m = hw // 128
    cap = max(1, min(m, max_lanes // 128))
    for d in range(cap, 0, -1):
        if m % d == 0:
            return 128 * d
    return 128


def grayscale(img, *, max_lanes=32 * 1024, vmem_limit_bytes=32 * 1024 * 1024):
    """img: (N, 1, H, W) -> (N, 3, H, W), broadcasting the channel axis."""
    N, C, H, W = img.shape
    if C == 3:
        # torch.expand with matching size is a no-op view.
        return img
    assert C == 1, "Grayscale expects a single input channel (expand semantics)"
    HW = H * W

    # Flatten spatial dims so the last (lane) axis is wide and dense.
    x = img.reshape(N, 1, HW)

    T = _pick_tile(HW, max_lanes)
    n_tiles = pl.cdiv(HW, T)  # exact (T divides HW, or T == HW)

    # Pure-bandwidth op: 1 read + 3 writes of the image, zero flops.
    bytes_accessed = N * HW * img.dtype.itemsize * (1 + 3)

    out_flat = pl.pallas_call(
        _grayscale_kernel,
        out_shape=jax.ShapeDtypeStruct((N, 3, HW), img.dtype),
        grid_spec=pltpu.PrefetchScalarGridSpec(
            num_scalar_prefetch=0,
            grid=(N, n_tiles),
            in_specs=[
                # Single input channel of batch n, spatial tile s.
                pl.BlockSpec((1, 1, T), lambda n, s: (n, 0, s)),
            ],
            # All 3 output channels written in one block per step.
            out_specs=pl.BlockSpec((1, 3, T), lambda n, s: (n, 0, s)),
        ),
        compiler_params=pltpu.CompilerParams(
            # Both axes independent -> megacore / dual-TC sharding.
            dimension_semantics=("parallel", "parallel"),
            vmem_limit_bytes=vmem_limit_bytes,
        ),
        cost_estimate=pl.CostEstimate(
            flops=0, transcendentals=0, bytes_accessed=bytes_accessed
        ),
    )(x)

    return out_flat.reshape(N, 3, H, W)


if __name__ == "__main__":
    key = jax.random.PRNGKey(0)
    # Small shapes consistent with the module: batch=2, channels=1, spatial=16.
    x = jax.random.normal(key, (2, 1, 16, 16), dtype=jnp.float32)

    out = grayscale(x)
    out = jax.block_until_ready(out)

    # Reference: plain JAX broadcast (mirrors torch.Tensor.expand).
    ref = jnp.broadcast_to(x, (2, 3, 16, 16))
    assert out.shape == (2, 3, 16, 16)
    assert out.dtype == x.dtype
    assert jnp.array_equal(out, ref)

    print("KERNEL_OK")
</pallas_src>

<mosaic_0001>
module attributes {stable_mosaic.version = 11 : i64} {
  func.func @_grayscale_kernel(%arg0: i32, %arg1: i32, %arg2: memref<1x1x256xf32, #tpu.memory_space<vmem>>, %arg3: memref<1x3x256xf32, #tpu.memory_space<vmem>>) attributes {dimension_semantics = [#tpu.dimension_semantics<parallel>, #tpu.dimension_semantics<parallel>], iteration_bounds = array<i64: 2, 1>, scalar_prefetch = 0 : i64, scratch_operands = 0 : i64, tpu.core_type = #tpu.core_type<tc>, window_params = [{transform_indices = @transform_0, window_bounds = array<i64: 1, 1, 256>}, {transform_indices = @transform_1, window_bounds = array<i64: 1, 3, 256>}]} {
    %c0 = arith.constant 0 : index
    %c0_0 = arith.constant 0 : index
    %c0_1 = arith.constant 0 : index
    %0 = vector.load %arg2[%c0, %c0_0, %c0_1] : memref<1x1x256xf32, #tpu.memory_space<vmem>>, vector<1x1x256xf32>
    %1 = vector.shape_cast %0 : vector<1x1x256xf32> to vector<1x1x256xf32>
    %2 = vector.broadcast %1 : vector<1x1x256xf32> to vector<1x3x256xf32>
    %c0_2 = arith.constant 0 : index
    %c0_3 = arith.constant 0 : index
    %c0_4 = arith.constant 0 : index
    %3 = vector.load %arg3[%c0_2, %c0_3, %c0_4] : memref<1x3x256xf32, #tpu.memory_space<vmem>>, vector<1x3x256xf32>
    tpu.vector_store %arg3[%c0_2, %c0_3, %c0_4], %2 {strides = array<i32>} : memref<1x3x256xf32, #tpu.memory_space<vmem>>, vector<1x3x256xf32>,
    return
  }
  func.func @transform_0(%arg0: i32, %arg1: i32) -> (i32, i32, i32) {
    %c0_i32 = arith.constant 0 : i32
    %c0_i32_0 = arith.constant 0 : i32
    return %arg0, %c0_i32, %arg1 : i32, i32, i32
  }
  func.func @transform_1(%arg0: i32, %arg1: i32) -> (i32, i32, i32) {
    %c0_i32 = arith.constant 0 : i32
    %c0_i32_0 = arith.constant 0 : i32
    return %arg0, %c0_i32, %arg1 : i32, i32, i32
  }
}

</mosaic_0001>

<llo_original>
// kernel: tpu_custom_call.1
$region0: #{tpu_custom_call.1}
  #allocation0 [shape = 'u32[]', space=smem, size = 0x4, offset = 0x4, fixed_abs, tag = 'smem constant byte address 0x4 - core index']
  #allocation1 [shape = 'u32[72,128]{1,0:T(1,128)}', space=vmem, size = 0x9000, scoped, tag = 'internal scratch']
  %s0 = inlined_call_operand.hbm [shape: f32[2,1,256], index: 0, kind: input, shape index: {}]
  %s1 = inlined_call_operand.vmem [shape: f32[2,3,256], index: 1, kind: output, shape index: {}]
  %s2 = sld [smem:[#allocation0]]
  $region41: #{tpu_custom_call.1} parent=0
    _
  %s4 = ssub.s32 1, %s2
  %s5 = scalar_select 0, %s4, %s2
  $region1: #{tpu_custom_call.1} parent=0
    #allocation2 [shape = 'u8[2048]{0}', space=vmem, size = 0x800, scoped, tag = 'input window, operand 0']
    #allocation3 [shape = 's32[2]{0}', space=sflag, size = 0x8, scoped, tag = 'scoped memory for tpu_custom_call.1']
    %6 = vsyncpa [#allocation3], 0
    %s7 = scalar_lea.sflag [#allocation3], 1
    %8 = vsyncpa %s7, 0
    loop: start=0, step=1, limit=4
    $region2: #{tpu_custom_call.1} parent=1 // loop_pre_header
      _
    $region3: #{tpu_custom_call.1} parent=1 // loop_header
      %s10 = sphi 0, %s14
      %p11 = scmp.ge.s32.totalorder %s10, 4
      %s17 = sphi 0, %s29
      %s18 = sphi 0, %s25
      %s19 = sphi 0, %s17
      %s20 = sphi 0, %s18
      %s21 = sphi 0, %s19
      %s22 = sphi 0, %s20
      %s34 = sphi 0, %s36
      %s37 = sphi 0, %s34
      %s38 = sphi 0, %s37
      %s54 = sphi 0, %s38
      %s62 = sphi 0, %s64
      %s65 = sphi 0, %s62
      %s66 = sphi 0, %s65
      %s82 = sphi 0, %s66
    $region4: #{tpu_custom_call.1} parent=1 // loop_header_branch
      %13 = sbr.rel (%p11) target = $region8
    $region5: #{tpu_custom_call.1} parent=1 // loop_body
      %s15 = ssub.s32 %s10, 1
      %s16 = ssub.s32 %s10, 2
      %s23 = sadd.s32 1, %s18
      %p24 = scmp.ge.s32.totalorder %s23, 1
      %s25 = scalar_select %p24, 0, %s23
      %s26 = sadd.s32 1, %s17
      %s27 = scalar_select %p24, %s26, %s17
      %p28 = scmp.ge.s32.totalorder %s27, 2
      %s29 = scalar_select %p28, 0, %s27
      %s30 = ssub.s32 %s17, %s29
      %s31 = ssub.s32 %s18, %s25
      %s32 = sor.u32 %s30, %s31
      %p33 = scmp.eq.s32.totalorder %s32, 0
      %s35 = sadd.s32 %s34, 1
      %s36 = scalar_select %p33, %s34, %s35
      %p39 = pneg %p33
      %p40 = scmp.eq.s32.totalorder %s10, 1
      %p41 = por %p39, %p40
      %p42 = scmp.ne.s32.totalorder %s34, %s37
      %p43 = scmp.eq.s32.totalorder %s10, 0
      %p44 = por %p42, %p43
      %p45 = scmp.ne.s32.totalorder %s34, %s37
      %p46 = scmp.eq.s32.totalorder %s15, 1
      %p47 = por %p45, %p46
      %p48 = scmp.ne.s32.totalorder %s37, %s38
      %p49 = scmp.eq.s32.totalorder %s15, 0
      %p50 = por %p48, %p49
      %p51 = scmp.ne.s32.totalorder %s37, %s38
      %p52 = scmp.eq.s32.totalorder %s16, 1
      %p53 = por %p51, %p52
      %p55 = scmp.ne.s32.totalorder %s38, %s54
      %p56 = scmp.eq.s32.totalorder %s16, 0
      %p57 = por %p55, %p56
      %s58 = ssub.s32 %s17, %s29
      %s59 = ssub.s32 %s18, %s25
      %s60 = sor.u32 %s58, %s59
      %p61 = scmp.eq.s32.totalorder %s60, 0
      %s63 = sadd.s32 %s62, 1
      %s64 = scalar_select %p61, %s62, %s63
      %p67 = pneg %p61
      %p68 = scmp.eq.s32.totalorder %s10, 1
      %p69 = por %p67, %p68
      %p70 = scmp.ne.s32.totalorder %s62, %s65
      %p71 = scmp.eq.s32.totalorder %s10, 0
      %p72 = por %p70, %p71
      %p73 = scmp.ne.s32.totalorder %s62, %s65
      %p74 = scmp.eq.s32.totalorder %s15, 1
      %p75 = por %p73, %p74
      %p76 = scmp.ne.s32.totalorder %s65, %s66
      %p77 = scmp.eq.s32.totalorder %s15, 0
      %p78 = por %p76, %p77
      %p79 = scmp.ne.s32.totalorder %s65, %s66
      %p80 = scmp.eq.s32.totalorder %s16, 1
      %p81 = por %p79, %p80
      %p83 = scmp.ne.s32.totalorder %s66, %s82
      %p84 = scmp.eq.s32.totalorder %s16, 0
      %p85 = por %p83, %p84
      %p86 = scmp.le.s32.totalorder 1, %s10
      %p87 = scmp.lt.s32.totalorder %s10, 3
      %p88 = pnand %p86, %p87
      %p89 = pneg %p88
      // Predicated region
      $region9: #{tpu_custom_call.1} parent=5 // pred_check
        _
      $region10: #{tpu_custom_call.1} parent=5 // pred_check_branch
        %91 = sbr.rel (%p88) target = $region12
      $region11: #{tpu_custom_call.1} parent=5 // pred_region
        %s92 = ssub.s32 %s10, 1
      $region12: #{tpu_custom_call.1} parent=5 // pred_fallthru
        _
      %p93 = scmp.lt.s32.totalorder %s10, 2
      // Predicated region
      $region13: #{tpu_custom_call.1} parent=5 // pred_check
        %p94 = pneg %p93
      $region14: #{tpu_custom_call.1} parent=5 // pred_check_branch
        %96 = sbr.rel (%p94) target = $region16
      $region15: #{tpu_custom_call.1} parent=5 // pred_region
        // Predicated region
        $region17: #{tpu_custom_call.1} parent=15 // pred_check
          %p97 = pneg %p44
        $region18: #{tpu_custom_call.1} parent=15 // pred_check_branch
          %99 = sbr.rel (%p97) target = $region20
        $region19: #{tpu_custom_call.1} parent=15 // pred_region
          %s100 = sand.u32 %s34, 1
          %s101 = scalar_lea.sflag [#allocation3], %s100
          %s102 = sand.u32 %s34, 1
          %s103 = smul.addr %s102, 2
          %s104 = scalar_lea.vmem [#allocation2], %s103
          %s105 = smul.u32 2, %s18
          %107 = vsyncadd %s101, 0
          %s108 = smul.addr %s17, 2
          %s109 = sadd.s32 %s105, %s108
          %s110 = scalar_lea.hbm %s0, %s109
          %s112 = sshll.u32 %s110, 4
          %s113 = int_to_ptr.hbm [resolvable:$true] %s112
          %s114 = sshll.u32 %s104, 4
          %s115 = int_to_ptr.vmem [resolvable:$true] %s114
          %117 = dma.hbm_to_vmem [thread:$0]  %s113, 32, %s115, %s101
        $region20: #{tpu_custom_call.1} parent=15 // pred_fallthru
          _
      $region16: #{tpu_custom_call.1} parent=5 // pred_fallthru
        _
      %p118 = scmp.le.s32.totalorder 1, %s10
      %p119 = scmp.lt.s32.totalorder %s10, 3
      %p120 = pnand %p118, %p119
      %p121 = pneg %p120
      // Predicated region
      $region21: #{tpu_custom_call.1} parent=5 // pred_check
        _
      $region22: #{tpu_custom_call.1} parent=5 // pred_check_branch
        %123 = sbr.rel (%p120) target = $region24
      $region23: #{tpu_custom_call.1} parent=5 // pred_region
        %s124 = ssub.s32 %s10, 1
        %s125 = sand.u32 %s37, 1
        %s126 = scalar_lea.sflag [#allocation3], %s125
        %s127 = sand.u32 %s37, 1
        %s128 = smul.addr %s127, 2
        %s129 = scalar_lea.vmem [#allocation2], %s128
        // Predicated region
        $region25: #{tpu_custom_call.1} parent=23 // pred_check
          %p130 = pneg %p50
        $region26: #{tpu_custom_call.1} parent=23 // pred_check_branch
          %132 = sbr.rel (%p130) target = $region28
        $region27: #{tpu_custom_call.1} parent=23 // pred_region
          %134 = dma.done %s126, 32
        $region28: #{tpu_custom_call.1} parent=23 // pred_fallthru
          _
        %s135 = sand.u32 %s37, 1
        %s136 = scalar_lea.sflag [#allocation3], %s135
        %s137 = sand.u32 %s37, 1
        %s138 = smul.addr %s137, 2
        %s139 = scalar_lea.vmem [#allocation2], %s138
        %p140 = pneg %p50
        %p141 = pneg %p47
        %p142 = pneg %p78
        %p143 = pneg %p75
        %s144 = smul.u32 2, %s20
        %p145 = scmp.lt.s32.totalorder %s19, 1
        %s146 = scalar_select %p145, %s19, 1
        %p147 = scmp.lt.s32.totalorder %s144, 1
        %s148 = scalar_select %p147, %s144, 1
        %s149 = smul.addr %s146, 2
        %s150 = sadd.s32 %s148, %s149
        %s151 = smul.addr %s150, 4
        %s152 = scalar_lea.vmem %s1, %s151
        %s153 = smul.u32 2, %s20
        %s154 = smul.u32 2, %s20
        %p155 = scmp.lt.s32.totalorder %s19, 1
        %s156 = scalar_select %p155, %s19, 1
        %p157 = scmp.lt.s32.totalorder %s154, 1
        %s158 = scalar_select %p157, %s154, 1
        %s159 = smul.addr %s156, 2
        %s160 = sadd.s32 %s158, %s159
        %s161 = smul.addr %s160, 4
        %s162 = scalar_lea.vmem %s1, %s161
        %s163 = smul.u32 2, %s20
        %v164 = vld [vmem:[%s129] sm:$0x3]
        %v166 = vperm.slane %v164, 0
        %v167 = vperm.slane %v164, 1
        %v168 = vrot.slane %v167, 4
        %vm169 = vcmask 1043456
        %v170 = vsel %vm169, %v166, %v168
        %172 = vst [vmem:[%s162] sm:$0x77] %v170
        %s173 = smul.u32 2, %s20
        %p174 = scmp.lt.s32.totalorder %s19, 1
        %s175 = scalar_select %p174, %s19, 1
        %p176 = scmp.lt.s32.totalorder %s173, 1
        %s177 = scalar_select %p176, %s173, 1
        %s178 = smul.addr %s175, 2
        %s179 = sadd.s32 %s177, %s178
        %s180 = smul.addr %s179, 4
        %s181 = scalar_lea.vmem %s1, %s180
        // Predicated region
        $region29: #{tpu_custom_call.1} parent=23 // pred_check
          %p182 = pneg %p75
        $region30: #{tpu_custom_call.1} parent=23 // pred_check_branch
          %184 = sbr.rel (%p182) target = $region32
        $region31: #{tpu_custom_call.1} parent=23 // pred_region
          %s185 = smul.u32 2, %s20
        $region32: #{tpu_custom_call.1} parent=23 // pred_fallthru
          _
      $region24: #{tpu_custom_call.1} parent=5 // pred_fallthru
        _
      %p186 = scmp.le.s32.totalorder 2, %s10
      // Predicated region
      $region33: #{tpu_custom_call.1} parent=5 // pred_check
        %p187 = pneg %p186
      $region34: #{tpu_custom_call.1} parent=5 // pred_check_branch
        %189 = sbr.rel (%p187) target = $region36
      $region35: #{tpu_custom_call.1} parent=5 // pred_region
        %s190 = ssub.s32 %s10, 2
        // Predicated region
        $region37: #{tpu_custom_call.1} parent=35 // pred_check
          %p191 = pneg %p81
        $region38: #{tpu_custom_call.1} parent=35 // pred_check_branch
          %193 = sbr.rel (%p191) target = $region40
        $region39: #{tpu_custom_call.1} parent=35 // pred_region
          %s194 = smul.u32 2, %s22
          %p195 = scmp.lt.s32.totalorder %s21, 1
          %s196 = scalar_select %p195, %s21, 1
          %p197 = scmp.lt.s32.totalorder %s194, 1
          %s198 = scalar_select %p197, %s194, 1
          %s199 = smul.addr %s196, 2
          %s200 = sadd.s32 %s198, %s199
          %s201 = smul.addr %s200, 4
          %s202 = scalar_lea.vmem %s1, %s201
        $region40: #{tpu_custom_call.1} parent=35 // pred_fallthru
          _
      $region36: #{tpu_custom_call.1} parent=5 // pred_fallthru
        _
    $region6: #{tpu_custom_call.1} parent=1 // loop_footer
      %s14 = sadd.s32 1, %s10
    $region7: #{tpu_custom_call.1} parent=1 // loop_footer_branch
      %9 = sbr.rel target = $region3
    $region8: #{tpu_custom_call.1} parent=1 // loop_exit
      _
    %203 = vsyncpa [#allocation3], 1
    %s204 = scalar_lea.sflag [#allocation3], 1
    %205 = vsyncpa %s204, 1

</llo_original>
